<compile_context>
chip_gen: v7x
topology: tpu7x:2x2x1
jax: 0.10.0
libtpu: 0.0.40
codegen_flags: <defaults>
</compile_context>

<pallas_src>
import functools

import jax
import jax.numpy as jnp
from jax import lax
from jax.experimental import pallas as pl
from jax.experimental.pallas import tpu as pltpu

CP = 128  # lane-padded output-channel count (Cout=64 -> 128 for lane-dense stores)


def _pick_batch_block(N, max_nb=32):
    """Largest divisor of N that is <= max_nb, preferring grid length >= 2
    (keeps both TensorCores busy on v7x while amortizing per-step overhead)."""
    divs = [d for d in range(1, min(N, max_nb) + 1) if N % d == 0]
    pref = [d for d in divs if N // d >= 2]
    return max(pref) if pref else max(divs)


def _make_conv_kernel(*, KH, C, W, OHp, OW, NB, Hs, stride):
    rows = NB * OHp
    wc = W * C
    ncols = OW * CP

    def kernel(x_ref, w_ref, b_ref, o_ref):
        # x_ref: (NB, stride*Hs, W*C)  phase-split rows: row = (h % stride)*Hs + h//stride
        # w_ref: (KH, W*C, OW*CP)      Toeplitz-expanded weights, resident in VMEM
        # b_ref: (1, OW*CP)            bias tiled across the OW output-column chunks
        # o_ref: (NB, OHp, OW*CP)      lane-dense output slab
        acc = jnp.broadcast_to(b_ref[...], (rows, ncols))  # hoisted bias (init once)
        for kh in range(KH):  # KH = 3, fully unrolled
            row0 = (kh % stride) * Hs + kh // stride
            # All NB images' rows for this kh, stacked into one fat LHS.
            lhs = x_ref[:, pl.ds(row0, OHp), :].reshape(rows, wc)
            acc = acc + jnp.dot(lhs, w_ref[kh], preferred_element_type=jnp.float32)
        o_ref[...] = acc.reshape(NB, OHp, ncols)  # one unmasked 128-lane-aligned store

    return kernel


def conv_small_pallas(x_nchw, weight_oihw, bias, *, stride=2):
    N, C, H, W = x_nchw.shape
    Cout, Cin, KH, KW = weight_oihw.shape
    assert Cin == C
    assert Cout <= CP
    assert H % stride == 0, "phase-split layout requires H % stride == 0"
    OH = (H - KH) // stride + 1
    OW = (W - KW) // stride + 1
    Hs = H // stride

    # Pad per-image output rows to a sublane multiple when the extra rows still
    # read valid (real, in-bounds) input; otherwise fall back to the exact OH.
    OHp = ((OH + 7) // 8) * 8
    max_row0 = max((kh % stride) * Hs + kh // stride for kh in range(KH))
    if max_row0 + OHp > stride * Hs:
        OHp = OH

    NB = _pick_batch_block(N)

    # ---- layout plumbing (small one-time copies; no im2col materialization) ----
    # x_r[n, (h % stride)*Hs + h//stride, w*C + c] = x[n, c, h, w]
    x_r = (
        jnp.transpose(x_nchw, (0, 2, 3, 1))   # (N, H, W, C)
        .reshape(N, Hs, stride, W * C)        # h -> (hh, phase)
        .transpose(0, 2, 1, 3)                # (N, stride, Hs, W*C)
        .reshape(N, stride * Hs, W * C)
    )
    # Toeplitz-expanded weight:
    #   w_toep[kh, (ow*stride + kw)*C + c, ow*CP + co] = weight[co, c, kh, kw]
    w_khkwc = jnp.transpose(weight_oihw, (2, 3, 1, 0)).reshape(KH, KW * C, Cout)
    w_toep = jnp.zeros((KH, W * C, OW * CP), dtype=weight_oihw.dtype)
    for ow in range(OW):
        col0 = ow * stride * C
        w_toep = w_toep.at[:, col0:col0 + KW * C, ow * CP:ow * CP + Cout].set(w_khkwc)
    # Bias tiled across the OW column chunks (lanes past Cout stay zero).
    b_tiled = jnp.tile(jnp.pad(bias, (0, CP - Cout)), (OW,)).reshape(1, OW * CP)

    kernel = _make_conv_kernel(
        KH=KH, C=C, W=W, OHp=OHp, OW=OW, NB=NB, Hs=Hs, stride=stride
    )

    cost = pl.CostEstimate(
        flops=2 * N * KH * OHp * (W * C) * (OW * CP),   # actual MXU work (incl. zeros)
        transcendentals=0,
        bytes_accessed=4 * (x_r.size + w_toep.size + b_tiled.size + N * OHp * OW * CP),
    )

    out_p = pl.pallas_call(
        kernel,
        out_shape=jax.ShapeDtypeStruct((N, OHp, OW * CP), jnp.float32),
        grid_spec=pltpu.PrefetchScalarGridSpec(
            num_scalar_prefetch=0,
            grid=(N // NB,),
            in_specs=[
                pl.BlockSpec((NB, stride * Hs, W * C), lambda g: (g, 0, 0)),  # NB images
                pl.BlockSpec((KH, W * C, OW * CP), lambda g: (0, 0, 0)),      # resident W
                pl.BlockSpec((1, OW * CP), lambda g: (0, 0)),                 # resident b
            ],
            out_specs=pl.BlockSpec((NB, OHp, OW * CP), lambda g: (g, 0, 0)),
        ),
        compiler_params=pltpu.CompilerParams(
            dimension_semantics=("parallel",),  # shards batch blocks across TCs on v7x
        ),
        cost_estimate=cost,
    )(x_r, w_toep, b_tiled)

    # ---- back to NCHW: (N, OHp, OW*CP) -> (N, Cout, OH, OW) ----
    out = out_p[:, :OH, :].reshape(N, OH, OW, CP)[..., :Cout]
    return jnp.transpose(out, (0, 3, 1, 2))


if __name__ == "__main__":
    key = jax.random.PRNGKey(0)
    kx, kwt, kb = jax.random.split(key, 3)

    N, C, H, W = 2, 3, 16, 16
    Cout, KH, KW, stride = 64, 3, 3, 2

    x = jax.random.normal(kx, (N, C, H, W), dtype=jnp.float32)

    # Deterministic init mimicking PyTorch's default Conv2d init:
    # uniform(-sqrt(k), sqrt(k)) with k = 1 / (C_in * KH * KW)
    fan_in = C * KH * KW
    bound = float(fan_in) ** -0.5
    weight = jax.random.uniform(
        kwt, (Cout, C, KH, KW), minval=-bound, maxval=bound, dtype=jnp.float32
    )
    bias = jax.random.uniform(
        kb, (Cout,), minval=-bound, maxval=bound, dtype=jnp.float32
    )

    conv_fn = jax.jit(functools.partial(conv_small_pallas, stride=stride))
    out = jax.block_until_ready(conv_fn(x, weight, bias))
    assert out.shape == (N, Cout, (H - KH) // stride + 1, (W - KW) // stride + 1)

    # Cross-check against XLA's conv for correctness.
    ref = lax.conv_general_dilated(
        x, weight, window_strides=(stride, stride), padding="VALID",
        dimension_numbers=("NCHW", "OIHW", "NCHW"),
    ) + bias.reshape(1, Cout, 1, 1)
    max_err = float(jnp.max(jnp.abs(out - ref)))
    assert jnp.allclose(out, ref, atol=5e-4, rtol=5e-4), max_err

    print("KERNEL_OK")
</pallas_src>

<mosaic_0001>
module attributes {stable_mosaic.version = 11 : i64} {
  func.func @kernel(%arg0: i32, %arg1: memref<1x16x48xf32, #tpu.memory_space<vmem>>, %arg2: memref<3x48x896xf32, #tpu.memory_space<vmem>>, %arg3: memref<1x896xf32, #tpu.memory_space<vmem>>, %arg4: memref<1x8x896xf32, #tpu.memory_space<vmem>>) attributes {dimension_semantics = [#tpu.dimension_semantics<parallel>], iteration_bounds = array<i64: 2>, scalar_prefetch = 0 : i64, scratch_operands = 0 : i64, tpu.core_type = #tpu.core_type<tc>, window_params = [{transform_indices = @transform_0, window_bounds = array<i64: 1, 16, 48>}, {pipeline_mode = #tpu.pipeline_mode<synchronous>, transform_indices = @transform_1, window_bounds = array<i64: 3, 48, 896>}, {pipeline_mode = #tpu.pipeline_mode<synchronous>, transform_indices = @transform_2, window_bounds = array<i64: 1, 896>}, {transform_indices = @transform_3, window_bounds = array<i64: 1, 8, 896>}]} {
    %c0 = arith.constant 0 : index
    %c0_0 = arith.constant 0 : index
    %0 = vector.load %arg3[%c0, %c0_0] : memref<1x896xf32, #tpu.memory_space<vmem>>, vector<1x896xf32>
    %1 = vector.shape_cast %0 : vector<1x896xf32> to vector<1x896xf32>
    %2 = vector.broadcast %1 : vector<1x896xf32> to vector<8x896xf32>
    %c0_1 = arith.constant 0 : index
    %c0_2 = arith.constant 0 : index
    %c0_3 = arith.constant 0 : index
    %3 = vector.load %arg1[%c0_1, %c0_2, %c0_3] : memref<1x16x48xf32, #tpu.memory_space<vmem>>, vector<1x8x48xf32>
    %4 = vector.shape_cast %3 : vector<1x8x48xf32> to vector<8x48xf32>
    %c0_4 = arith.constant 0 : index
    %c0_5 = arith.constant 0 : index
    %c0_6 = arith.constant 0 : index
    %5 = vector.load %arg2[%c0_4, %c0_5, %c0_6] : memref<3x48x896xf32, #tpu.memory_space<vmem>>, vector<1x48x896xf32>
    %6 = vector.shape_cast %5 : vector<1x48x896xf32> to vector<48x896xf32>
    %cst = arith.constant dense<0.000000e+00> : vector<8x896xf32>
    %7 = tpu.matmul %4, %6, %cst {dimension_numbers = #tpu.dot_dimension_numbers<[1], [0], [0], [1], [0, 0, 1, 1], [], []>} : vector<8x48xf32>, vector<48x896xf32>, vector<8x896xf32> -> vector<8x896xf32>
    %8 = arith.addf %2, %7 : vector<8x896xf32>
    %c0_7 = arith.constant 0 : index
    %c8 = arith.constant 8 : index
    %c0_8 = arith.constant 0 : index
    %9 = vector.load %arg1[%c0_7, %c8, %c0_8] : memref<1x16x48xf32, #tpu.memory_space<vmem>>, vector<1x8x48xf32>
    %10 = vector.shape_cast %9 : vector<1x8x48xf32> to vector<8x48xf32>
    %c1 = arith.constant 1 : index
    %c0_9 = arith.constant 0 : index
    %c0_10 = arith.constant 0 : index
    %11 = vector.load %arg2[%c1, %c0_9, %c0_10] : memref<3x48x896xf32, #tpu.memory_space<vmem>>, vector<1x48x896xf32>
    %12 = vector.shape_cast %11 : vector<1x48x896xf32> to vector<48x896xf32>
    %cst_11 = arith.constant dense<0.000000e+00> : vector<8x896xf32>
    %13 = tpu.matmul %10, %12, %cst_11 {dimension_numbers = #tpu.dot_dimension_numbers<[1], [0], [0], [1], [0, 0, 1, 1], [], []>} : vector<8x48xf32>, vector<48x896xf32>, vector<8x896xf32> -> vector<8x896xf32>
    %14 = arith.addf %8, %13 : vector<8x896xf32>
    %c0_12 = arith.constant 0 : index
    %c1_13 = arith.constant 1 : index
    %c0_14 = arith.constant 0 : index
    %15 = vector.load %arg1[%c0_12, %c1_13, %c0_14] : memref<1x16x48xf32, #tpu.memory_space<vmem>>, vector<1x8x48xf32>
    %16 = vector.shape_cast %15 : vector<1x8x48xf32> to vector<8x48xf32>
    %c2 = arith.constant 2 : index
    %c0_15 = arith.constant 0 : index
    %c0_16 = arith.constant 0 : index
    %17 = vector.load %arg2[%c2, %c0_15, %c0_16] : memref<3x48x896xf32, #tpu.memory_space<vmem>>, vector<1x48x896xf32>
    %18 = vector.shape_cast %17 : vector<1x48x896xf32> to vector<48x896xf32>
    %cst_17 = arith.constant dense<0.000000e+00> : vector<8x896xf32>
    %19 = tpu.matmul %16, %18, %cst_17 {dimension_numbers = #tpu.dot_dimension_numbers<[1], [0], [0], [1], [0, 0, 1, 1], [], []>} : vector<8x48xf32>, vector<48x896xf32>, vector<8x896xf32> -> vector<8x896xf32>
    %20 = arith.addf %14, %19 : vector<8x896xf32>
    %21 = vector.shape_cast %20 : vector<8x896xf32> to vector<1x8x896xf32>
    %c0_18 = arith.constant 0 : index
    %c0_19 = arith.constant 0 : index
    %c0_20 = arith.constant 0 : index
    %22 = vector.load %arg4[%c0_18, %c0_19, %c0_20] : memref<1x8x896xf32, #tpu.memory_space<vmem>>, vector<1x8x896xf32>
    tpu.vector_store %arg4[%c0_18, %c0_19, %c0_20], %21 {strides = array<i32>} : memref<1x8x896xf32, #tpu.memory_space<vmem>>, vector<1x8x896xf32>,
    return
  }
  func.func @transform_0(%arg0: i32) -> (i32, i32, i32) {
    %c0_i32 = arith.constant 0 : i32
    %c0_i32_0 = arith.constant 0 : i32
    %c0_i32_1 = arith.constant 0 : i32
    return %arg0, %c0_i32, %c0_i32_0 : i32, i32, i32
  }
  func.func @transform_1(%arg0: i32) -> (i32, i32, i32) {
    %c0_i32 = arith.constant 0 : i32
    %c0_i32_0 = arith.constant 0 : i32
    %c0_i32_1 = arith.constant 0 : i32
    %c0_i32_2 = arith.constant 0 : i32
    return %c0_i32, %c0_i32_0, %c0_i32_1 : i32, i32, i32
  }
  func.func @transform_2(%arg0: i32) -> (i32, i32) {
    %c0_i32 = arith.constant 0 : i32
    %c0_i32_0 = arith.constant 0 : i32
    %c0_i32_1 = arith.constant 0 : i32
    return %c0_i32, %c0_i32_0 : i32, i32
  }
  func.func @transform_3(%arg0: i32) -> (i32, i32, i32) {
    %c0_i32 = arith.constant 0 : i32
    %c0_i32_0 = arith.constant 0 : i32
    %c0_i32_1 = arith.constant 0 : i32
    return %arg0, %c0_i32, %c0_i32_0 : i32, i32, i32
  }
}

</mosaic_0001>

<llo_original>
// kernel: conv_small_pallas.1
$region0: #{conv_small_pallas.1}
  #allocation0 [shape = 'u32[]', space=smem, size = 0x4, offset = 0x4, fixed_abs, tag = 'smem constant byte address 0x4 - core index']
  #allocation1 [shape = 'u32[144,128]{1,0:T(1,128)}', space=vmem, size = 0x12000, scoped, tag = 'internal scratch']
  %s0 = inlined_call_operand.vmem [shape: f32[2,16,48], index: 0, kind: input, shape index: {}]
  %s1 = inlined_call_operand.vmem [shape: f32[3,48,896], index: 1, kind: input, shape index: {}]
  %s2 = inlined_call_operand.vmem [shape: f32[1,896], index: 2, kind: input, shape index: {}]
  %s3 = inlined_call_operand.vmem [shape: f32[2,8,896], index: 3, kind: output, shape index: {}]
  %s4 = sld [smem:[#allocation0]]
  $region45: #{conv_small_pallas.1} parent=0
    _
  %s6 = ssub.s32 1, %s4
  %s7 = scalar_select 0, %s6, %s4
  loop: start=0, step=1, limit=4
  $region2: #{conv_small_pallas.1} parent=0 // loop_pre_header
    _
  $region3: #{conv_small_pallas.1} parent=0 // loop_header
    %s9 = sphi 0, %s13
    %p10 = scmp.ge.s32.totalorder %s9, 4
    %s19 = sphi 0, %s21
    %s22 = sphi 0, %s19
    %s23 = sphi 0, %s22
    %s39 = sphi 0, %s23
    %s43 = sphi 0, %s43
    %s45 = sphi 0, %s43
    %s46 = sphi 0, %s45
    %s60 = sphi 0, %s46
    %s64 = sphi 0, %s64
    %s66 = sphi 0, %s64
    %s67 = sphi 0, %s66
    %s81 = sphi 0, %s67
    %s87 = sphi 0, %s89
    %s90 = sphi 0, %s87
    %s91 = sphi 0, %s90
    %s107 = sphi 0, %s91
  $region4: #{conv_small_pallas.1} parent=0 // loop_header_branch
    %12 = sbr.rel (%p10) target = $region8
  $region5: #{conv_small_pallas.1} parent=0 // loop_body
    %s14 = ssub.s32 %s9, 1
    %s15 = ssub.s32 %s9, 2
    %s16 = sadd.s32 %s9, 1
    %s17 = ssub.s32 %s9, %s16
    %p18 = scmp.eq.s32.totalorder %s17, 0
    %s20 = sadd.s32 %s19, 1
    %s21 = scalar_select %p18, %s19, %s20
    %p24 = pneg %p18
    %p25 = scmp.eq.s32.totalorder %s9, 1
    %p26 = por %p24, %p25
    %p27 = scmp.ne.s32.totalorder %s19, %s22
    %p28 = scmp.eq.s32.totalorder %s9, 0
    %p29 = por %p27, %p28
    %p30 = scmp.ne.s32.totalorder %s19, %s22
    %p31 = scmp.eq.s32.totalorder %s14, 1
    %p32 = por %p30, %p31
    %p33 = scmp.ne.s32.totalorder %s22, %s23
    %p34 = scmp.eq.s32.totalorder %s14, 0
    %p35 = por %p33, %p34
    %p36 = scmp.ne.s32.totalorder %s22, %s23
    %p37 = scmp.eq.s32.totalorder %s15, 1
    %p38 = por %p36, %p37
    %p40 = scmp.ne.s32.totalorder %s23, %s39
    %p41 = scmp.eq.s32.totalorder %s15, 0
    %p42 = por %p40, %p41
    %s44 = sadd.s32 %s43, 1
    %p47 = scmp.eq.s32.totalorder %s9, 1
    %p48 = scmp.ne.s32.totalorder %s43, %s45
    %p49 = scmp.eq.s32.totalorder %s9, 0
    %p50 = por %p48, %p49
    %p51 = scmp.ne.s32.totalorder %s43, %s45
    %p52 = scmp.eq.s32.totalorder %s14, 1
    %p53 = por %p51, %p52
    %p54 = scmp.ne.s32.totalorder %s45, %s46
    %p55 = scmp.eq.s32.totalorder %s14, 0
    %p56 = por %p54, %p55
    %p57 = scmp.ne.s32.totalorder %s45, %s46
    %p58 = scmp.eq.s32.totalorder %s15, 1
    %p59 = por %p57, %p58
    %p61 = scmp.ne.s32.totalorder %s46, %s60
    %p62 = scmp.eq.s32.totalorder %s15, 0
    %p63 = por %p61, %p62
    %s65 = sadd.s32 %s64, 1
    %p68 = scmp.eq.s32.totalorder %s9, 1
    %p69 = scmp.ne.s32.totalorder %s64, %s66
    %p70 = scmp.eq.s32.totalorder %s9, 0
    %p71 = por %p69, %p70
    %p72 = scmp.ne.s32.totalorder %s64, %s66
    %p73 = scmp.eq.s32.totalorder %s14, 1
    %p74 = por %p72, %p73
    %p75 = scmp.ne.s32.totalorder %s66, %s67
    %p76 = scmp.eq.s32.totalorder %s14, 0
    %p77 = por %p75, %p76
    %p78 = scmp.ne.s32.totalorder %s66, %s67
    %p79 = scmp.eq.s32.totalorder %s15, 1
    %p80 = por %p78, %p79
    %p82 = scmp.ne.s32.totalorder %s67, %s81
    %p83 = scmp.eq.s32.totalorder %s15, 0
    %p84 = por %p82, %p83
    %s85 = ssub.s32 %s9, %s16
    %p86 = scmp.eq.s32.totalorder %s85, 0
    %s88 = sadd.s32 %s87, 1
    %s89 = scalar_select %p86, %s87, %s88
    %p92 = pneg %p86
    %p93 = scmp.eq.s32.totalorder %s9, 1
    %p94 = por %p92, %p93
    %p95 = scmp.ne.s32.totalorder %s87, %s90
    %p96 = scmp.eq.s32.totalorder %s9, 0
    %p97 = por %p95, %p96
    %p98 = scmp.ne.s32.totalorder %s87, %s90
    %p99 = scmp.eq.s32.totalorder %s14, 1
    %p100 = por %p98, %p99
    %p101 = scmp.ne.s32.totalorder %s90, %s91
    %p102 = scmp.eq.s32.totalorder %s14, 0
    %p103 = por %p101, %p102
    %p104 = scmp.ne.s32.totalorder %s90, %s91
    %p105 = scmp.eq.s32.totalorder %s15, 1
    %p106 = por %p104, %p105
    %p108 = scmp.ne.s32.totalorder %s91, %s107
    %p109 = scmp.eq.s32.totalorder %s15, 0
    %p110 = por %p108, %p109
    %p111 = scmp.le.s32.totalorder 1, %s9
    %p112 = scmp.lt.s32.totalorder %s9, 3
    %p113 = pnand %p111, %p112
    %p114 = pneg %p113
    // Predicated region
    $region9: #{conv_small_pallas.1} parent=5 // pred_check
      _
    $region10: #{conv_small_pallas.1} parent=5 // pred_check_branch
      %116 = sbr.rel (%p113) target = $region12
    $region11: #{conv_small_pallas.1} parent=5 // pred_region
      %s117 = ssub.s32 %s9, 1
      // Predicated region
      $region13: #{conv_small_pallas.1} parent=11 // pred_check
        %p118 = pneg %p56
      $region14: #{conv_small_pallas.1} parent=11 // pred_check_branch
        %120 = sbr.rel (%p118) target = $region16
      $region15: #{conv_small_pallas.1} parent=11 // pred_region
        _
      $region16: #{conv_small_pallas.1} parent=11 // pred_fallthru
        _
      // Predicated region
      $region17: #{conv_small_pallas.1} parent=11 // pred_check
        %p121 = pneg %p77
      $region18: #{conv_small_pallas.1} parent=11 // pred_check_branch
        %123 = sbr.rel (%p121) target = $region20
      $region19: #{conv_small_pallas.1} parent=11 // pred_region
        _
      $region20: #{conv_small_pallas.1} parent=11 // pred_fallthru
        _
    $region12: #{conv_small_pallas.1} parent=5 // pred_fallthru
      _
    %p124 = scmp.lt.s32.totalorder %s9, 2
    // Predicated region
    $region21: #{conv_small_pallas.1} parent=5 // pred_check
      %p125 = pneg %p124
    $region22: #{conv_small_pallas.1} parent=5 // pred_check_branch
      %127 = sbr.rel (%p125) target = $region24
    $region23: #{conv_small_pallas.1} parent=5 // pred_region
      // Predicated region
      $region25: #{conv_small_pallas.1} parent=23 // pred_check
        %p128 = pneg %p29
      $region26: #{conv_small_pallas.1} parent=23 // pred_check_branch
        %130 = sbr.rel (%p128) target = $region28
      $region27: #{conv_small_pallas.1} parent=23 // pred_region
        %p131 = scmp.lt.s32.totalorder %s9, 1
        %s132 = scalar_select %p131, %s9, 1
        %s133 = smul.addr %s132, 2
        %s134 = smul.addr %s133, 8
        %s135 = scalar_lea.vmem %s0, %s134
      $region28: #{conv_small_pallas.1} parent=23 // pred_fallthru
        _
    $region24: #{conv_small_pallas.1} parent=5 // pred_fallthru
      _
    %p136 = scmp.le.s32.totalorder 1, %s9
    %p137 = scmp.lt.s32.totalorder %s9, 3
    %p138 = pnand %p136, %p137
    %p139 = pneg %p138
    // Predicated region
    $region29: #{conv_small_pallas.1} parent=5 // pred_check
      _
    $region30: #{conv_small_pallas.1} parent=5 // pred_check_branch
      %141 = sbr.rel (%p138) target = $region32
    $region31: #{conv_small_pallas.1} parent=5 // pred_region
      %s142 = ssub.s32 %s9, 1
      %p143 = scmp.lt.s32.totalorder %s14, 1
      %s144 = scalar_select %p143, %s14, 1
      %s145 = smul.addr %s144, 2
      %s146 = smul.addr %s145, 8
      %s147 = scalar_lea.vmem %s0, %s146
      %p148 = pneg %p35
      %p149 = pneg %p32
      %p150 = pneg %p56
      %p151 = pneg %p53
      %p152 = pneg %p77
      %p153 = pneg %p74
      %p154 = pneg %p103
      %p155 = pneg %p100
      %p156 = scmp.lt.s32.totalorder %s14, 1
      %s157 = scalar_select %p156, %s14, 1
      %s158 = smul.addr %s157, 7
      %s159 = smul.addr %s158, 8
      %s160 = scalar_lea.vmem %s3, %s159
      %p161 = scmp.lt.s32.totalorder %s14, 1
      %s162 = scalar_select %p161, %s14, 1
      %s163 = smul.addr %s162, 2
      %s164 = smul.addr %s163, 8
      %s165 = scalar_lea.vmem %s0, %s164
      %p166 = scmp.lt.s32.totalorder %s14, 1
      %s167 = scalar_select %p166, %s14, 1
      %s168 = smul.addr %s167, 7
      %s169 = smul.addr %s168, 8
      %s170 = scalar_lea.vmem %s3, %s169
      %v171 = vld [vmem:[%s2] sm:$0xff]
      %v173 = vlaneseq
      %v174 = vshrl.u32 %v173, 7
      %v175 = vsub.s32 0, %v174
      %v176 = vrot.slane %v171, %v175
      %v177 = vlaneseq
      %v178 = vshrl.u32 %v177, 7
      %v179 = vsub.s32 1, %v178
      %v180 = vrot.slane %v171, %v179
      %v181 = vlaneseq
      %v182 = vshrl.u32 %v181, 7
      %v183 = vsub.s32 2, %v182
      %v184 = vrot.slane %v171, %v183
      %v185 = vlaneseq
      %v186 = vshrl.u32 %v185, 7
      %v187 = vsub.s32 3, %v186
      %v188 = vrot.slane %v171, %v187
      %v189 = vlaneseq
      %v190 = vshrl.u32 %v189, 7
      %v191 = vsub.s32 4, %v190
      %v192 = vrot.slane %v171, %v191
      %v193 = vlaneseq
      %v194 = vshrl.u32 %v193, 7
      %v195 = vsub.s32 5, %v194
      %v196 = vrot.slane %v171, %v195
      %v197 = vlaneseq
      %v198 = vshrl.u32 %v197, 7
      %v199 = vsub.s32 6, %v198
      %v200 = vrot.slane %v171, %v199
      %v208 = vld [vmem:[%s165] sm:$0xff]
      %v209 = vld [vmem:[%s1] sm:$0xff]
      %v210 = vld [vmem:[%s1 + $0x8] sm:$0xff]
      %v211 = vld [vmem:[%s1 + $0x10] sm:$0xff]
      %v212 = vld [vmem:[%s1 + $0x18] sm:$0xff]
      %v213 = vld [vmem:[%s1 + $0x20] sm:$0xff]
      %v214 = vld [vmem:[%s1 + $0x28] sm:$0xff]
      %v215 = vld [vmem:[%s1 + $0x30] sm:$0xff]
      %v216 = vld [vmem:[%s1 + $0x38] sm:$0xff]
      %v217 = vld [vmem:[%s1 + $0x40] sm:$0xff]
      %v218 = vld [vmem:[%s1 + $0x48] sm:$0xff]
      %v219 = vld [vmem:[%s1 + $0x50] sm:$0xff]
      %v220 = vld [vmem:[%s1 + $0x58] sm:$0xff]
      %v221 = vld [vmem:[%s1 + $0x60] sm:$0xff]
      %v222 = vld [vmem:[%s1 + $0x68] sm:$0xff]
      %v223 = vld [vmem:[%s1 + $0x70] sm:$0xff]
      %v224 = vld [vmem:[%s1 + $0x78] sm:$0xff]
      %v225 = vld [vmem:[%s1 + $0x80] sm:$0xff]
      %v226 = vld [vmem:[%s1 + $0x88] sm:$0xff]
      %v227 = vld [vmem:[%s1 + $0x90] sm:$0xff]
      %v228 = vld [vmem:[%s1 + $0x98] sm:$0xff]
      %v229 = vld [vmem:[%s1 + $0xa0] sm:$0xff]
      %v230 = vld [vmem:[%s1 + $0xa8] sm:$0xff]
      %v231 = vld [vmem:[%s1 + $0xb0] sm:$0xff]
      %v232 = vld [vmem:[%s1 + $0xb8] sm:$0xff]
      %v233 = vld [vmem:[%s1 + $0xc0] sm:$0xff]
      %v234 = vld [vmem:[%s1 + $0xc8] sm:$0xff]
      %v235 = vld [vmem:[%s1 + $0xd0] sm:$0xff]
      %v236 = vld [vmem:[%s1 + $0xd8] sm:$0xff]
      %v237 = vld [vmem:[%s1 + $0xe0] sm:$0xff]
      %v238 = vld [vmem:[%s1 + $0xe8] sm:$0xff]
      %v239 = vld [vmem:[%s1 + $0xf0] sm:$0xff]
      %v240 = vld [vmem:[%s1 + $0xf8] sm:$0xff]
      %v241 = vld [vmem:[%s1 + $0x100] sm:$0xff]
      %v242 = vld [vmem:[%s1 + $0x108] sm:$0xff]
      %v243 = vld [vmem:[%s1 + $0x110] sm:$0xff]
      %v244 = vld [vmem:[%s1 + $0x118] sm:$0xff]
      %v245 = vld [vmem:[%s1 + $0x120] sm:$0xff]
      %v246 = vld [vmem:[%s1 + $0x128] sm:$0xff]
      %v247 = vld [vmem:[%s1 + $0x130] sm:$0xff]
      %v248 = vld [vmem:[%s1 + $0x138] sm:$0xff]
      %v249 = vld [vmem:[%s1 + $0x140] sm:$0xff]
      %v250 = vld [vmem:[%s1 + $0x148] sm:$0xff]
      %vm251 = vcmask 392192
      %v253 = vsel %vm251, %v208, 0
      %255 = vmatprep.subr.mxu0 %v210
      %256 = vmatpush1.msra.mxu0 %v209
      %257 = vmatprep.subr.mxu0 %v217
      %258 = vmatpush1.msra.mxu0 %v216
      %259 = vmatprep.subr.mxu0 %v224
      %260 = vmatpush1.msra.mxu0 %v223
      %261 = vmatprep.subr.mxu0 %v231
      %262 = vmatpush1.msra.mxu0 %v230
      %263 = vmatprep.subr.mxu0 %v238
      %264 = vmatpush1.msra.mxu0 %v237
      %265 = vmatprep.subr.mxu0 %v245
      %266 = vmatpush1.msra.mxu0 %v244
      %267 = vmatprep.subr.mxu0 0.0
      %268 = vmatpush1.msra.mxu0 0.0
      %269 = vmatprep.subr.mxu0 0.0
      %270 = vmatpush1.msra.mxu0 0.0
      %271 = vmatprep.subr.mxu0 0.0
      %272 = vmatpush1.msra.mxu0 0.0
      %273 = vmatprep.subr.mxu0 0.0
      %274 = vmatpush1.msra.mxu0 0.0
      %275 = vmatprep.subr.mxu0 0.0
      %276 = vmatpush1.msra.mxu0 0.0
      %277 = vmatprep.subr.mxu0 0.0
      %278 = vmatpush1.msra.mxu0 0.0
      %279 = vmatprep.subr.mxu0 0.0
      %280 = vmatpush1.msra.mxu0 0.0
      %281 = vmatprep.subr.mxu0 0.0
      %282 = vmatpush1.msra.mxu0 0.0
      %283 = vmatprep.subr.mxu0 0.0
      %284 = vmatpush1.msra.mxu0 0.0
      %285 = vmatprep.subr.mxu0 0.0
      %286 = vmatpush1.msra.mxu0 0.0
      %287 = vmatprep.subr.mxu0 0.0
      %288 = vmatpush1.msra.mxu0 0.0
      %289 = vmatprep.subr.mxu0 0.0
      %290 = vmatpush1.msra.mxu0 0.0
      %291 = vmatprep.subr.mxu0 0.0
      %292 = vmatpush1.msra.mxu0 0.0
      %293 = vmatprep.subr.mxu0 0.0
      %294 = vmatpush1.msra.mxu0 0.0
      %295 = vmatprep.subr.mxu0 0.0
      %296 = vmatpush1.msra.mxu0 0.0
      %297 = vmatprep.subr.mxu0 0.0
      %298 = vmatpush1.msra.mxu0 0.0
      %299 = vmatprep.subr.mxu0 0.0
      %300 = vmatpush1.msra.mxu0 0.0
      %301 = vmatprep.subr.mxu0 0.0
      %302 = vmatpush1.msra.mxu0 0.0
      %303 = vmatprep.subr.mxu0 0.0
      %304 = vmatpush1.msra.mxu0 0.0
      %305 = vmatprep.subr.mxu0 0.0
      %306 = vmatpush1.msra.mxu0 0.0
      %307 = vmatprep.subr.mxu0 0.0
      %308 = vmatpush1.msra.mxu0 0.0
      %309 = vmatprep.subr.mxu0 0.0
      %310 = vmatpush1.msra.mxu0 0.0
      %311 = vmatprep.subr.mxu0 0.0
      %312 = vmatpush1.msra.mxu0 0.0
      %313 = vmatprep.subr.mxu0 0.0
      %314 = vmatpush1.msra.mxu0 0.0
      %315 = vmatprep.subr.mxu0 0.0
      %316 = vmatpush1.msra.mxu0 0.0
      %317 = vmatprep.subr.mxu0 0.0
      %318 = vmatpush1.msra.mxu0 0.0
      %319 = vmatprep.mubr.f32.mxu0 0.0
      %320 = vmatmul.mubr.f32.gmra.mrb[0].mxu0 %v253
      %v321 = vpop.f32.mrb[0].mxu0
      %v322 = vadd.f32 0.0, %v321
      %v323 = vpop.f32.mrb[0].mxu0
      %v324 = vadd.f32 0.0, %v323
      %325 = vdwg.mxu0
      %326 = vmatprep.subr.mxu0 %v212
      %327 = vmatpush1.msra.mxu0 %v211
      %328 = vmatprep.subr.mxu0 %v219
      %329 = vmatpush1.msra.mxu0 %v218
      %330 = vmatprep.subr.mxu0 %v226
      %331 = vmatpush1.msra.mxu0 %v225
      %332 = vmatprep.subr.mxu0 %v233
      %333 = vmatpush1.msra.mxu0 %v232
      %334 = vmatprep.subr.mxu0 %v240
      %335 = vmatpush1.msra.mxu0 %v239
      %336 = vmatprep.subr.mxu0 %v247
      %337 = vmatpush1.msra.mxu0 %v246
      %338 = vmatprep.subr.mxu0 0.0
      %339 = vmatpush1.msra.mxu0 0.0
      %340 = vmatprep.subr.mxu0 0.0
      %341 = vmatpush1.msra.mxu0 0.0
      %342 = vmatprep.subr.mxu0 0.0
      %343 = vmatpush1.msra.mxu0 0.0
      %344 = vmatprep.subr.mxu0 0.0
      %345 = vmatpush1.msra.mxu0 0.0
      %346 = vmatprep.subr.mxu0 0.0
      %347 = vmatpush1.msra.mxu0 0.0
      %348 = vmatprep.subr.mxu0 0.0
      %349 = vmatpush1.msra.mxu0 0.0
      %350 = vmatprep.subr.mxu0 0.0
      %351 = vmatpush1.msra.mxu0 0.0
      %352 = vmatprep.subr.mxu0 0.0
      %353 = vmatpush1.msra.mxu0 0.0
      %354 = vmatprep.subr.mxu0 0.0
      %355 = vmatpush1.msra.mxu0 0.0
      %356 = vmatprep.subr.mxu0 0.0
      %357 = vmatpush1.msra.mxu0 0.0
      %358 = vmatprep.subr.mxu0 0.0
      %359 = vmatpush1.msra.mxu0 0.0
      %360 = vmatprep.subr.mxu0 0.0
      %361 = vmatpush1.msra.mxu0 0.0
      %362 = vmatprep.subr.mxu0 0.0
      %363 = vmatpush1.msra.mxu0 0.0
      %364 = vmatprep.subr.mxu0 0.0
      %365 = vmatpush1.msra.mxu0 0.0
      %366 = vmatprep.subr.mxu0 0.0
      %367 = vmatpush1.msra.mxu0 0.0
      %368 = vmatprep.subr.mxu0 0.0
      %369 = vmatpush1.msra.mxu0 0.0
      %370 = vmatprep.subr.mxu0 0.0
      %371 = vmatpush1.msra.mxu0 0.0
      %372 = vmatprep.subr.mxu0 0.0
      %373 = vmatpush1.msra.mxu0 0.0
      %374 = vmatprep.subr.mxu0 0.0
      %375 = vmatpush1.msra.mxu0 0.0
      %376 = vmatprep.subr.mxu0 0.0
      %377 = vmatpush1.msra.mxu0 0.0
      %378 = vmatprep.subr.mxu0 0.0
      %379 = vmatpush1.msra.mxu0 0.0
      %380 = vmatprep.subr.mxu0 0.0
      %381 = vmatpush1.msra.mxu0 0.0
      %382 = vmatprep.subr.mxu0 0.0
      %383 = vmatpush1.msra.mxu0 0.0
      %384 = vmatprep.subr.mxu0 0.0
      %385 = vmatpush1.msra.mxu0 0.0
      %386 = vmatprep.subr.mxu0 0.0
      %387 = vmatpush1.msra.mxu0 0.0
      %388 = vmatprep.subr.mxu0 0.0
      %389 = vmatpush1.msra.mxu0 0.0
      %390 = vmatprep.mubr.f32.mxu0 0.0
      %391 = vmatmul.mubr.f32.gmra.mrb[0].mxu0 %v253
      %v392 = vpop.f32.mrb[0].mxu0
      %v393 = vadd.f32 0.0, %v392
      %v394 = vpop.f32.mrb[0].mxu0
      %v395 = vadd.f32 0.0, %v394
      %396 = vdwg.mxu0
      %397 = vmatprep.subr.mxu0 %v214
      %398 = vmatpush1.msra.mxu0 %v213
      %399 = vmatprep.subr.mxu0 %v221
      %400 = vmatpush1.msra.mxu0 %v220
      %401 = vmatprep.subr.mxu0 %v228
      %402 = vmatpush1.msra.mxu0 %v227
      %403 = vmatprep.subr.mxu0 %v235
      %404 = vmatpush1.msra.mxu0 %v234
      %405 = vmatprep.subr.mxu0 %v242
      %406 = vmatpush1.msra.mxu0 %v241
      %407 = vmatprep.subr.mxu0 %v249
      %408 = vmatpush1.msra.mxu0 %v248
      %409 = vmatprep.subr.mxu0 0.0
      %410 = vmatpush1.msra.mxu0 0.0
      %411 = vmatprep.subr.mxu0 0.0
      %412 = vmatpush1.msra.mxu0 0.0
      %413 = vmatprep.subr.mxu0 0.0
      %414 = vmatpush1.msra.mxu0 0.0
      %415 = vmatprep.subr.mxu0 0.0
      %416 = vmatpush1.msra.mxu0 0.0
      %417 = vmatprep.subr.mxu0 0.0
      %418 = vmatpush1.msra.mxu0 0.0
      %419 = vmatprep.subr.mxu0 0.0
      %420 = vmatpush1.msra.mxu0 0.0
      %421 = vmatprep.subr.mxu0 0.0
      %422 = vmatpush1.msra.mxu0 0.0
      %423 = vmatprep.subr.mxu0 0.0
      %424 = vmatpush1.msra.mxu0 0.0
      %425 = vmatprep.subr.mxu0 0.0
      %426 = vmatpush1.msra.mxu0 0.0
      %427 = vmatprep.subr.mxu0 0.0
      %428 = vmatpush1.msra.mxu0 0.0
      %429 = vmatprep.subr.mxu0 0.0
      %430 = vmatpush1.msra.mxu0 0.0
      %431 = vmatprep.subr.mxu0 0.0
      %432 = vmatpush1.msra.mxu0 0.0
      %433 = vmatprep.subr.mxu0 0.0
      %434 = vmatpush1.msra.mxu0 0.0
      %435 = vmatprep.subr.mxu0 0.0
      %436 = vmatpush1.msra.mxu0 0.0
      %437 = vmatprep.subr.mxu0 0.0
      %438 = vmatpush1.msra.mxu0 0.0
      %439 = vmatprep.subr.mxu0 0.0
      %440 = vmatpush1.msra.mxu0 0.0
      %441 = vmatprep.subr.mxu0 0.0
      %442 = vmatpush1.msra.mxu0 0.0
      %443 = vmatprep.subr.mxu0 0.0
      %444 = vmatpush1.msra.mxu0 0.0
      %445 = vmatprep.subr.mxu0 0.0
      %446 = vmatpush1.msra.mxu0 0.0
      %447 = vmatprep.subr.mxu0 0.0
      %448 = vmatpush1.msra.mxu0 0.0
      %449 = vmatprep.subr.mxu0 0.0
      %450 = vmatpush1.msra.mxu0 0.0
      %451 = vmatprep.subr.mxu0 0.0
      %452 = vmatpush1.msra.mxu0 0.0
      %453 = vmatprep.subr.mxu0 0.0
      %454 = vmatpush1.msra.mxu0 0.0
      %455 = vmatprep.subr.mxu0 0.0
      %456 = vmatpush1.msra.mxu0 0.0
      %457 = vmatprep.subr.mxu0 0.0
      %458 = vmatpush1.msra.mxu0 0.0
      %459 = vmatprep.subr.mxu0 0.0
      %460 = vmatpush1.msra.mxu0 0.0
      %461 = vmatprep.mubr.f32.mxu0 0.0
      %462 = vmatmul.mubr.f32.gmra.mrb[0].mxu0 %v253
      %v463 = vpop.f32.mrb[0].mxu0
      %v464 = vadd.f32 0.0, %v463
      %v465 = vpop.f32.mrb[0].mxu0
      %v466 = vadd.f32 0.0, %v465
      %467 = vdwg.mxu0
      %468 = vmatprep.subr.mxu0 0.0
      %469 = vmatpush1.msra.mxu0 %v215
      %470 = vmatprep.subr.mxu0 0.0
      %471 = vmatpush1.msra.mxu0 %v222
      %472 = vmatprep.subr.mxu0 0.0
      %473 = vmatpush1.msra.mxu0 %v229
      %474 = vmatprep.subr.mxu0 0.0
      %475 = vmatpush1.msra.mxu0 %v236
      %476 = vmatprep.subr.mxu0 0.0
      %477 = vmatpush1.msra.mxu0 %v243
      %478 = vmatprep.subr.mxu0 0.0
      %479 = vmatpush1.msra.mxu0 %v250
      %480 = vmatprep.subr.mxu0 0.0
      %481 = vmatpush1.msra.mxu0 0.0
      %482 = vmatprep.subr.mxu0 0.0
      %483 = vmatpush1.msra.mxu0 0.0
      %484 = vmatprep.subr.mxu0 0.0
      %485 = vmatpush1.msra.mxu0 0.0
      %486 = vmatprep.subr.mxu0 0.0
      %487 = vmatpush1.msra.mxu0 0.0
      %488 = vmatprep.subr.mxu0 0.0
      %489 = vmatpush1.msra.mxu0 0.0
      %490 = vmatprep.subr.mxu0 0.0
      %491 = vmatpush1.msra.mxu0 0.0
      %492 = vmatprep.subr.mxu0 0.0
      %493 = vmatpush1.msra.mxu0 0.0
      %494 = vmatprep.subr.mxu0 0.0
      %495 = vmatpush1.msra.mxu0 0.0
      %496 = vmatprep.subr.mxu0 0.0
      %497 = vmatpush1.msra.mxu0 0.0
      %498 = vmatprep.subr.mxu0 0.0
      %499 = vmatpush1.msra.mxu0 0.0
      %500 = vmatprep.subr.mxu0 0.0
      %501 = vmatpush1.msra.mxu0 0.0
      %502 = vmatprep.subr.mxu0 0.0
      %503 = vmatpush1.msra.mxu0 0.0
      %504 = vmatprep.subr.mxu0 0.0
      %505 = vmatpush1.msra.mxu0 0.0
      %506 = vmatprep.subr.mxu0 0.0
      %507 = vmatpush1.msra.mxu0 0.0
      %508 = vmatprep.subr.mxu0 0.0
      %509 = vmatpush1.msra.mxu0 0.0
      %510 = vmatprep.subr.mxu0 0.0
      %511 = vmatpush1.msra.mxu0 0.0
      %512 = vmatprep.subr.mxu0 0.0
      %513 = vmatpush1.msra.mxu0 0.0
      %514 = vmatprep.subr.mxu0 0.0
      %515 = vmatpush1.msra.mxu0 0.0
      %516 = vmatprep.subr.mxu0 0.0
      %517 = vmatpush1.msra.mxu0 0.0
      %518 = vmatprep.subr.mxu0 0.0
      %519 = vmatpush1.msra.mxu0 0.0
      %520 = vmatprep.subr.mxu0 0.0
      %521 = vmatpush1.msra.mxu0 0.0
      %522 = vmatprep.subr.mxu0 0.0
      %523 = vmatpush1.msra.mxu0 0.0
      %524 = vmatprep.subr.mxu0 0.0
      %525 = vmatpush1.msra.mxu0 0.0
      %526 = vmatprep.subr.mxu0 0.0
      %527 = vmatpush1.msra.mxu0 0.0
      %528 = vmatprep.subr.mxu0 0.0
      %529 = vmatpush1.msra.mxu0 0.0
      %530 = vmatprep.subr.mxu0 0.0
      %531 = vmatpush1.msra.mxu0 0.0
      %532 = vmatprep.mubr.f32.mxu0 0.0
      %533 = vmatmul.mubr.f32.gmra.mrb[0].mxu0 %v253
      %v534 = vpop.f32.mrb[0].mxu0
      %v535 = vadd.f32 0.0, %v534
      %v536 = vpop.f32.mrb[0].mxu0
      %537 = vdwg.mxu0
      %v538 = vadd.f32 %v176, %v322
      %v539 = vadd.f32 %v180, %v324
      %v540 = vadd.f32 %v184, %v393
      %v541 = vadd.f32 %v188, %v395
      %v542 = vadd.f32 %v192, %v464
      %v543 = vadd.f32 %v196, %v466
      %v544 = vadd.f32 %v200, %v535
      %v545 = vld [vmem:[%s165 + $0x8] sm:$0xff]
      %s546 = scalar_lea.vmem %s1, 336
      %v547 = vld [vmem:[%s546] sm:$0xff]
      %v548 = vld [vmem:[%s546 + $0x8] sm:$0xff]
      %v549 = vld [vmem:[%s546 + $0x10] sm:$0xff]
      %v550 = vld [vmem:[%s546 + $0x18] sm:$0xff]
      %v551 = vld [vmem:[%s546 + $0x20] sm:$0xff]
      %v552 = vld [vmem:[%s546 + $0x28] sm:$0xff]
      %v553 = vld [vmem:[%s546 + $0x30] sm:$0xff]
      %v554 = vld [vmem:[%s546 + $0x38] sm:$0xff]
      %v555 = vld [vmem:[%s546 + $0x40] sm:$0xff]
      %v556 = vld [vmem:[%s546 + $0x48] sm:$0xff]
      %v557 = vld [vmem:[%s546 + $0x50] sm:$0xff]
      %v558 = vld [vmem:[%s546 + $0x58] sm:$0xff]
      %v559 = vld [vmem:[%s546 + $0x60] sm:$0xff]
      %v560 = vld [vmem:[%s546 + $0x68] sm:$0xff]
      %v561 = vld [vmem:[%s546 + $0x70] sm:$0xff]
      %v562 = vld [vmem:[%s546 + $0x78] sm:$0xff]
      %v563 = vld [vmem:[%s546 + $0x80] sm:$0xff]
      %v564 = vld [vmem:[%s546 + $0x88] sm:$0xff]
      %v565 = vld [vmem:[%s546 + $0x90] sm:$0xff]
      %v566 = vld [vmem:[%s546 + $0x98] sm:$0xff]
      %v567 = vld [vmem:[%s546 + $0xa0] sm:$0xff]
      %v568 = vld [vmem:[%s546 + $0xa8] sm:$0xff]
      %v569 = vld [vmem:[%s546 + $0xb0] sm:$0xff]
      %v570 = vld [vmem:[%s546 + $0xb8] sm:$0xff]
      %v571 = vld [vmem:[%s546 + $0xc0] sm:$0xff]
      %v572 = vld [vmem:[%s546 + $0xc8] sm:$0xff]
      %v573 = vld [vmem:[%s546 + $0xd0] sm:$0xff]
      %v574 = vld [vmem:[%s546 + $0xd8] sm:$0xff]
      %v575 = vld [vmem:[%s546 + $0xe0] sm:$0xff]
      %v576 = vld [vmem:[%s546 + $0xe8] sm:$0xff]
      %v577 = vld [vmem:[%s546 + $0xf0] sm:$0xff]
      %v578 = vld [vmem:[%s546 + $0xf8] sm:$0xff]
      %v579 = vld [vmem:[%s546 + $0x100] sm:$0xff]
      %v580 = vld [vmem:[%s546 + $0x108] sm:$0xff]
      %v581 = vld [vmem:[%s546 + $0x110] sm:$0xff]
      %v582 = vld [vmem:[%s546 + $0x118] sm:$0xff]
      %v583 = vld [vmem:[%s546 + $0x120] sm:$0xff]
      %v584 = vld [vmem:[%s546 + $0x128] sm:$0xff]
      %v585 = vld [vmem:[%s546 + $0x130] sm:$0xff]
      %v586 = vld [vmem:[%s546 + $0x138] sm:$0xff]
      %v587 = vld [vmem:[%s546 + $0x140] sm:$0xff]
      %v588 = vld [vmem:[%s546 + $0x148] sm:$0xff]
      %v590 = vsel %vm251, %v545, 0
      %592 = vmatprep.subr.mxu0 %v548
      %593 = vmatpush1.msra.mxu0 %v547
      %594 = vmatprep.subr.mxu0 %v555
      %595 = vmatpush1.msra.mxu0 %v554
      %596 = vmatprep.subr.mxu0 %v562
      %597 = vmatpush1.msra.mxu0 %v561
      %598 = vmatprep.subr.mxu0 %v569
      %599 = vmatpush1.msra.mxu0 %v568
      %600 = vmatprep.subr.mxu0 %v576
      %601 = vmatpush1.msra.mxu0 %v575
      %602 = vmatprep.subr.mxu0 %v583
      %603 = vmatpush1.msra.mxu0 %v582
      %604 = vmatprep.subr.mxu0 0.0
      %605 = vmatpush1.msra.mxu0 0.0
      %606 = vmatprep.subr.mxu0 0.0
      %607 = vmatpush1.msra.mxu0 0.0
      %608 = vmatprep.subr.mxu0 0.0
      %609 = vmatpush1.msra.mxu0 0.0
      %610 = vmatprep.subr.mxu0 0.0
      %611 = vmatpush1.msra.mxu0 0.0
      %612 = vmatprep.subr.mxu0 0.0
      %613 = vmatpush1.msra.mxu0 0.0
      %614 = vmatprep.subr.mxu0 0.0
      %615 = vmatpush1.msra.mxu0 0.0
      %616 = vmatprep.subr.mxu0 0.0
      %617 = vmatpush1.msra.mxu0 0.0
      %618 = vmatprep.subr.mxu0 0.0
      %619 = vmatpush1.msra.mxu0 0.0
      %620 = vmatprep.subr.mxu0 0.0
      %621 = vmatpush1.msra.mxu0 0.0
      %622 = vmatprep.subr.mxu0 0.0
      %623 = vmatpush1.msra.mxu0 0.0
      %624 = vmatprep.subr.mxu0 0.0
      %625 = vmatpush1.msra.mxu0 0.0
      %626 = vmatprep.subr.mxu0 0.0
      %627 = vmatpush1.msra.mxu0 0.0
      %628 = vmatprep.subr.mxu0 0.0
      %629 = vmatpush1.msra.mxu0 0.0
      %630 = vmatprep.subr.mxu0 0.0
      %631 = vmatpush1.msra.mxu0 0.0
      %632 = vmatprep.subr.mxu0 0.0
      %633 = vmatpush1.msra.mxu0 0.0
      %634 = vmatprep.subr.mxu0 0.0
      %635 = vmatpush1.msra.mxu0 0.0
      %636 = vmatprep.subr.mxu0 0.0
      %637 = vmatpush1.msra.mxu0 0.0
      %638 = vmatprep.subr.mxu0 0.0
      %639 = vmatpush1.msra.mxu0 0.0
      %640 = vmatprep.subr.mxu0 0.0
      %641 = vmatpush1.msra.mxu0 0.0
      %642 = vmatprep.subr.mxu0 0.0
      %643 = vmatpush1.msra.mxu0 0.0
      %644 = vmatprep.subr.mxu0 0.0
      %645 = vmatpush1.msra.mxu0 0.0
      %646 = vmatprep.subr.mxu0 0.0
      %647 = vmatpush1.msra.mxu0 0.0
      %648 = vmatprep.subr.mxu0 0.0
      %649 = vmatpush1.msra.mxu0 0.0
      %650 = vmatprep.subr.mxu0 0.0
      %651 = vmatpush1.msra.mxu0 0.0
      %652 = vmatprep.subr.mxu0 0.0
      %653 = vmatpush1.msra.mxu0 0.0
      %654 = vmatprep.subr.mxu0 0.0
      %655 = vmatpush1.msra.mxu0 0.0
      %656 = vmatprep.mubr.f32.mxu0 0.0
      %657 = vmatmul.mubr.f32.gmra.mrb[0].mxu0 %v590
      %v658 = vpop.f32.mrb[0].mxu0
      %v659 = vadd.f32 0.0, %v658
      %v660 = vpop.f32.mrb[0].mxu0
      %v661 = vadd.f32 0.0, %v660
      %662 = vdwg.mxu0
      %663 = vmatprep.subr.mxu0 %v550
      %664 = vmatpush1.msra.mxu0 %v549
      %665 = vmatprep.subr.mxu0 %v557
      %666 = vmatpush1.msra.mxu0 %v556
      %667 = vmatprep.subr.mxu0 %v564
      %668 = vmatpush1.msra.mxu0 %v563
      %669 = vmatprep.subr.mxu0 %v571
      %670 = vmatpush1.msra.mxu0 %v570
      %671 = vmatprep.subr.mxu0 %v578
      %672 = vmatpush1.msra.mxu0 %v577
      %673 = vmatprep.subr.mxu0 %v585
      %674 = vmatpush1.msra.mxu0 %v584
      %675 = vmatprep.subr.mxu0 0.0
      %676 = vmatpush1.msra.mxu0 0.0
      %677 = vmatprep.subr.mxu0 0.0
      %678 = vmatpush1.msra.mxu0 0.0
      %679 = vmatprep.subr.mxu0 0.0
      %680 = vmatpush1.msra.mxu0 0.0
      %681 = vmatprep.subr.mxu0 0.0
      %682 = vmatpush1.msra.mxu0 0.0
      %683 = vmatprep.subr.mxu0 0.0
      %684 = vmatpush1.msra.mxu0 0.0
      %685 = vmatprep.subr.mxu0 0.0
      %686 = vmatpush1.msra.mxu0 0.0
      %687 = vmatprep.subr.mxu0 0.0
      %688 = vmatpush1.msra.mxu0 0.0
      %689 = vmatprep.subr.mxu0 0.0
      %690 = vmatpush1.msra.mxu0 0.0
      %691 = vmatprep.subr.mxu0 0.0
      %692 = vmatpush1.msra.mxu0 0.0
      %693 = vmatprep.subr.mxu0 0.0
      %694 = vmatpush1.msra.mxu0 0.0
      %695 = vmatprep.subr.mxu0 0.0
      %696 = vmatpush1.msra.mxu0 0.0
      %697 = vmatprep.subr.mxu0 0.0
      %698 = vmatpush1.msra.mxu0 0.0
      %699 = vmatprep.subr.mxu0 0.0
      %700 = vmatpush1.msra.mxu0 0.0
      %701 = vmatprep.subr.mxu0 0.0
      %702 = vmatpush1.msra.mxu0 0.0
      %703 = vmatprep.subr.mxu0 0.0
      %704 = vmatpush1.msra.mxu0 0.0
      %705 = vmatprep.subr.mxu0 0.0
      %706 = vmatpush1.msra.mxu0 0.0
      %707 = vmatprep.subr.mxu0 0.0
      %708 = vmatpush1.msra.mxu0 0.0
      %709 = vmatprep.subr.mxu0 0.0
      %710 = vmatpush1.msra.mxu0 0.0
      %711 = vmatprep.subr.mxu0 0.0
      %712 = vmatpush1.msra.mxu0 0.0
      %713 = vmatprep.subr.mxu0 0.0
      %714 = vmatpush1.msra.mxu0 0.0
      %715 = vmatprep.subr.mxu0 0.0
      %716 = vmatpush1.msra.mxu0 0.0
      %717 = vmatprep.subr.mxu0 0.0
      %718 = vmatpush1.msra.mxu0 0.0
      %719 = vmatprep.subr.mxu0 0.0
      %720 = vmatpush1.msra.mxu0 0.0
      %721 = vmatprep.subr.mxu0 0.0
      %722 = vmatpush1.msra.mxu0 0.0
      %723 = vmatprep.subr.mxu0 0.0
      %724 = vmatpush1.msra.mxu0 0.0
      %725 = vmatprep.subr.mxu0 0.0
      %726 = vmatpush1.msra.mxu0 0.0
      %727 = vmatprep.mubr.f32.mxu0 0.0
      %728 = vmatmul.mubr.f32.gmra.mrb[0].mxu0 %v590
      %v729 = vpop.f32.mrb[0].mxu0
      %v730 = vadd.f32 0.0, %v729
      %v731 = vpop.f32.mrb[0].mxu0
      %v732 = vadd.f32 0.0, %v731
      %733 = vdwg.mxu0
      %734 = vmatprep.subr.mxu0 %v552
      %735 = vmatpush1.msra.mxu0 %v551
      %736 = vmatprep.subr.mxu0 %v559
      %737 = vmatpush1.msra.mxu0 %v558
      %738 = vmatprep.subr.mxu0 %v566
      %739 = vmatpush1.msra.mxu0 %v565
      %740 = vmatprep.subr.mxu0 %v573
      %741 = vmatpush1.msra.mxu0 %v572
      %742 = vmatprep.subr.mxu0 %v580
      %743 = vmatpush1.msra.mxu0 %v579
      %744 = vmatprep.subr.mxu0 %v587
      %745 = vmatpush1.msra.mxu0 %v586
      %746 = vmatprep.subr.mxu0 0.0
      %747 = vmatpush1.msra.mxu0 0.0
      %748 = vmatprep.subr.mxu0 0.0
      %749 = vmatpush1.msra.mxu0 0.0
      %750 = vmatprep.subr.mxu0 0.0
      %751 = vmatpush1.msra.mxu0 0.0
      %752 = vmatprep.subr.mxu0 0.0
      %753 = vmatpush1.msra.mxu0 0.0
      %754 = vmatprep.subr.mxu0 0.0
      %755 = vmatpush1.msra.mxu0 0.0
      %756 = vmatprep.subr.mxu0 0.0
      %757 = vmatpush1.msra.mxu0 0.0
      %758 = vmatprep.subr.mxu0 0.0
      %759 = vmatpush1.msra.mxu0 0.0
      %760 = vmatprep.subr.mxu0 0.0
      %761 = vmatpush1.msra.mxu0 0.0
      %762 = vmatprep.subr.mxu0 0.0
      %763 = vmatpush1.msra.mxu0 0.0
      %764 = vmatprep.subr.mxu0 0.0
      %765 = vmatpush1.msra.mxu0 0.0
      %766 = vmatprep.subr.mxu0 0.0
      %767 = vmatpush1.msra.mxu0 0.0
      %768 = vmatprep.subr.mxu0 0.0
      %769 = vmatpush1.msra.mxu0 0.0
      %770 = vmatprep.subr.mxu0 0.0
      %771 = vmatpush1.msra.mxu0 0.0
      %772 = vmatprep.subr.mxu0 0.0
      %773 = vmatpush1.msra.mxu0 0.0
      %774 = vmatprep.subr.mxu0 0.0
      %775 = vmatpush1.msra.mxu0 0.0
      %776 = vmatprep.subr.mxu0 0.0
      %777 = vmatpush1.msra.mxu0 0.0
      %778 = vmatprep.subr.mxu0 0.0
      %779 = vmatpush1.msra.mxu0 0.0
      %780 = vmatprep.subr.mxu0 0.0
      %781 = vmatpush1.msra.mxu0 0.0
      %782 = vmatprep.subr.mxu0 0.0
      %783 = vmatpush1.msra.mxu0 0.0
      %784 = vmatprep.subr.mxu0 0.0
      %785 = vmatpush1.msra.mxu0 0.0
      %786 = vmatprep.subr.mxu0 0.0
      %787 = vmatpush1.msra.mxu0 0.0
      %788 = vmatprep.subr.mxu0 0.0
      %789 = vmatpush1.msra.mxu0 0.0
      %790 = vmatprep.subr.mxu0 0.0
      %791 = vmatpush1.msra.mxu0 0.0
      %792 = vmatprep.subr.mxu0 0.0
      %793 = vmatpush1.msra.mxu0 0.0
      %794 = vmatprep.subr.mxu0 0.0
      %795 = vmatpush1.msra.mxu0 0.0
      %796 = vmatprep.subr.mxu0 0.0
      %797 = vmatpush1.msra.mxu0 0.0
      %798 = vmatprep.mubr.f32.mxu0 0.0
      %799 = vmatmul.mubr.f32.gmra.mrb[0].mxu0 %v590
      %v800 = vpop.f32.mrb[0].mxu0
      %v801 = vadd.f32 0.0, %v800
      %v802 = vpop.f32.mrb[0].mxu0
      %v803 = vadd.f32 0.0, %v802
      %804 = vdwg.mxu0
      %805 = vmatprep.subr.mxu0 0.0
      %806 = vmatpush1.msra.mxu0 %v553
      %807 = vmatprep.subr.mxu0 0.0
      %808 = vmatpush1.msra.mxu0 %v560
      %809 = vmatprep.subr.mxu0 0.0
      %810 = vmatpush1.msra.mxu0 %v567
      %811 = vmatprep.subr.mxu0 0.0
      %812 = vmatpush1.msra.mxu0 %v574
      %813 = vmatprep.subr.mxu0 0.0
      %814 = vmatpush1.msra.mxu0 %v581
      %815 = vmatprep.subr.mxu0 0.0
      %816 = vmatpush1.msra.mxu0 %v588
      %817 = vmatprep.subr.mxu0 0.0
      %818 = vmatpush1.msra.mxu0 0.0
      %819 = vmatprep.subr.mxu0 0.0
      %820 = vmatpush1.msra.mxu0 0.0
      %821 = vmatprep.subr.mxu0 0.0
      %822 = vmatpush1.msra.mxu0 0.0
      %823 = vmatprep.subr.mxu0 0.0
      %824 = vmatpush1.msra.mxu0 0.0
      %825 = vmatprep.subr.mxu0 0.0
      %826 = vmatpush1.msra.mxu0 0.0
      %827 = vmatprep.subr.mxu0 0.0
      %828 = vmatpush1.msra.mxu0 0.0
      %829 = vmatprep.subr.mxu0 0.0
      %830 = vmatpush1.msra.mxu0 0.0
      %831 = vmatprep.subr.mxu0 0.0
      %832 = vmatpush1.msra.mxu0 0.0
      %833 = vmatprep.subr.mxu0 0.0
      %834 = vmatpush1.msra.mxu0 0.0
      %835 = vmatprep.subr.mxu0 0.0
      %836 = vmatpush1.msra.mxu0 0.0
      %837 = vmatprep.subr.mxu0 0.0
      %838 = vmatpush1.msra.mxu0 0.0
      %839 = vmatprep.subr.mxu0 0.0
      %840 = vmatpush1.msra.mxu0 0.0
      %841 = vmatprep.subr.mxu0 0.0
      %842 = vmatpush1.msra.mxu0 0.0
      %843 = vmatprep.subr.mxu0 0.0
      %844 = vmatpush1.msra.mxu0 0.0
      %845 = vmatprep.subr.mxu0 0.0
      %846 = vmatpush1.msra.mxu0 0.0
      %847 = vmatprep.subr.mxu0 0.0
      %848 = vmatpush1.msra.mxu0 0.0
      %849 = vmatprep.subr.mxu0 0.0
      %850 = vmatpush1.msra.mxu0 0.0
      %851 = vmatprep.subr.mxu0 0.0
      %852 = vmatpush1.msra.mxu0 0.0
      %853 = vmatprep.subr.mxu0 0.0
      %854 = vmatpush1.msra.mxu0 0.0
      %855 = vmatprep.subr.mxu0 0.0
      %856 = vmatpush1.msra.mxu0 0.0
      %857 = vmatprep.subr.mxu0 0.0
      %858 = vmatpush1.msra.mxu0 0.0
      %859 = vmatprep.subr.mxu0 0.0
      %860 = vmatpush1.msra.mxu0 0.0
      %861 = vmatprep.subr.mxu0 0.0
      %862 = vmatpush1.msra.mxu0 0.0
      %863 = vmatprep.subr.mxu0 0.0
      %864 = vmatpush1.msra.mxu0 0.0
      %865 = vmatprep.subr.mxu0 0.0
      %866 = vmatpush1.msra.mxu0 0.0
      %867 = vmatprep.subr.mxu0 0.0
      %868 = vmatpush1.msra.mxu0 0.0
      %869 = vmatprep.mubr.f32.mxu0 0.0
      %870 = vmatmul.mubr.f32.gmra.mrb[0].mxu0 %v590
      %v871 = vpop.f32.mrb[0].mxu0
      %v872 = vadd.f32 0.0, %v871
      %v873 = vpop.f32.mrb[0].mxu0
      %874 = vdwg.mxu0
      %v875 = vadd.f32 %v538, %v659
      %v876 = vadd.f32 %v539, %v661
      %v877 = vadd.f32 %v540, %v730
      %v878 = vadd.f32 %v541, %v732
      %v879 = vadd.f32 %v542, %v801
      %v880 = vadd.f32 %v543, %v803
      %v881 = vadd.f32 %v544, %v872
      %v882 = vld [vmem:[%s165 + $0x1] sm:$0xff]
      %s883 = scalar_lea.vmem %s1, 672
      %v884 = vld [vmem:[%s883] sm:$0xff]
      %v885 = vld [vmem:[%s883 + $0x8] sm:$0xff]
      %v886 = vld [vmem:[%s883 + $0x10] sm:$0xff]
      %v887 = vld [vmem:[%s883 + $0x18] sm:$0xff]
      %v888 = vld [vmem:[%s883 + $0x20] sm:$0xff]
      %v889 = vld [vmem:[%s883 + $0x28] sm:$0xff]
      %v890 = vld [vmem:[%s883 + $0x30] sm:$0xff]
      %v891 = vld [vmem:[%s883 + $0x38] sm:$0xff]
      %v892 = vld [vmem:[%s883 + $0x40] sm:$0xff]
      %v893 = vld [vmem:[%s883 + $0x48] sm:$0xff]
      %v894 = vld [vmem:[%s883 + $0x50] sm:$0xff]
      %v895 = vld [vmem:[%s883 + $0x58] sm:$0xff]
      %v896 = vld [vmem:[%s883 + $0x60] sm:$0xff]
      %v897 = vld [vmem:[%s883 + $0x68] sm:$0xff]
      %v898 = vld [vmem:[%s883 + $0x70] sm:$0xff]
      %v899 = vld [vmem:[%s883 + $0x78] sm:$0xff]
      %v900 = vld [vmem:[%s883 + $0x80] sm:$0xff]
      %v901 = vld [vmem:[%s883 + $0x88] sm:$0xff]
      %v902 = vld [vmem:[%s883 + $0x90] sm:$0xff]
      %v903 = vld [vmem:[%s883 + $0x98] sm:$0xff]
      %v904 = vld [vmem:[%s883 + $0xa0] sm:$0xff]
      %v905 = vld [vmem:[%s883 + $0xa8] sm:$0xff]
      %v906 = vld [vmem:[%s883 + $0xb0] sm:$0xff]
      %v907 = vld [vmem:[%s883 + $0xb8] sm:$0xff]
      %v908 = vld [vmem:[%s883 + $0xc0] sm:$0xff]
      %v909 = vld [vmem:[%s883 + $0xc8] sm:$0xff]
      %v910 = vld [vmem:[%s883 + $0xd0] sm:$0xff]
      %v911 = vld [vmem:[%s883 + $0xd8] sm:$0xff]
      %v912 = vld [vmem:[%s883 + $0xe0] sm:$0xff]
      %v913 = vld [vmem:[%s883 + $0xe8] sm:$0xff]
      %v914 = vld [vmem:[%s883 + $0xf0] sm:$0xff]
      %v915 = vld [vmem:[%s883 + $0xf8] sm:$0xff]
      %v916 = vld [vmem:[%s883 + $0x100] sm:$0xff]
      %v917 = vld [vmem:[%s883 + $0x108] sm:$0xff]
      %v918 = vld [vmem:[%s883 + $0x110] sm:$0xff]
      %v919 = vld [vmem:[%s883 + $0x118] sm:$0xff]
      %v920 = vld [vmem:[%s883 + $0x120] sm:$0xff]
      %v921 = vld [vmem:[%s883 + $0x128] sm:$0xff]
      %v922 = vld [vmem:[%s883 + $0x130] sm:$0xff]
      %v923 = vld [vmem:[%s883 + $0x138] sm:$0xff]
      %v924 = vld [vmem:[%s883 + $0x140] sm:$0xff]
      %v925 = vld [vmem:[%s883 + $0x148] sm:$0xff]
      %v927 = vsel %vm251, %v882, 0
      %929 = vmatprep.subr.mxu0 %v885
      %930 = vmatpush1.msra.mxu0 %v884
      %931 = vmatprep.subr.mxu0 %v892
      %932 = vmatpush1.msra.mxu0 %v891
      %933 = vmatprep.subr.mxu0 %v899
      %934 = vmatpush1.msra.mxu0 %v898
      %935 = vmatprep.subr.mxu0 %v906
      %936 = vmatpush1.msra.mxu0 %v905
      %937 = vmatprep.subr.mxu0 %v913
      %938 = vmatpush1.msra.mxu0 %v912
      %939 = vmatprep.subr.mxu0 %v920
      %940 = vmatpush1.msra.mxu0 %v919
      %941 = vmatprep.subr.mxu0 0.0
      %942 = vmatpush1.msra.mxu0 0.0
      %943 = vmatprep.subr.mxu0 0.0
      %944 = vmatpush1.msra.mxu0 0.0
      %945 = vmatprep.subr.mxu0 0.0
      %946 = vmatpush1.msra.mxu0 0.0
      %947 = vmatprep.subr.mxu0 0.0
      %948 = vmatpush1.msra.mxu0 0.0
      %949 = vmatprep.subr.mxu0 0.0
      %950 = vmatpush1.msra.mxu0 0.0
      %951 = vmatprep.subr.mxu0 0.0
      %952 = vmatpush1.msra.mxu0 0.0
      %953 = vmatprep.subr.mxu0 0.0
      %954 = vmatpush1.msra.mxu0 0.0
      %955 = vmatprep.subr.mxu0 0.0
      %956 = vmatpush1.msra.mxu0 0.0
      %957 = vmatprep.subr.mxu0 0.0
      %958 = vmatpush1.msra.mxu0 0.0
      %959 = vmatprep.subr.mxu0 0.0
      %960 = vmatpush1.msra.mxu0 0.0
      %961 = vmatprep.subr.mxu0 0.0
      %962 = vmatpush1.msra.mxu0 0.0
      %963 = vmatprep.subr.mxu0 0.0
      %964 = vmatpush1.msra.mxu0 0.0
      %965 = vmatprep.subr.mxu0 0.0
      %966 = vmatpush1.msra.mxu0 0.0
      %967 = vmatprep.subr.mxu0 0.0
      %968 = vmatpush1.msra.mxu0 0.0
      %969 = vmatprep.subr.mxu0 0.0
      %970 = vmatpush1.msra.mxu0 0.0
      %971 = vmatprep.subr.mxu0 0.0
      %972 = vmatpush1.msra.mxu0 0.0
      %973 = vmatprep.subr.mxu0 0.0
      %974 = vmatpush1.msra.mxu0 0.0
      %975 = vmatprep.subr.mxu0 0.0
      %976 = vmatpush1.msra.mxu0 0.0
      %977 = vmatprep.subr.mxu0 0.0
      %978 = vmatpush1.msra.mxu0 0.0
      %979 = vmatprep.subr.mxu0 0.0
      %980 = vmatpush1.msra.mxu0 0.0
      %981 = vmatprep.subr.mxu0 0.0
      %982 = vmatpush1.msra.mxu0 0.0
      %983 = vmatprep.subr.mxu0 0.0
      %984 = vmatpush1.msra.mxu0 0.0
      %985 = vmatprep.subr.mxu0 0.0
      %986 = vmatpush1.msra.mxu0 0.0
      %987 = vmatprep.subr.mxu0 0.0
      %988 = vmatpush1.msra.mxu0 0.0
      %989 = vmatprep.subr.mxu0 0.0
      %990 = vmatpush1.msra.mxu0 0.0
      %991 = vmatprep.subr.mxu0 0.0
      %992 = vmatpush1.msra.mxu0 0.0
      %993 = vmatprep.mubr.f32.mxu0 0.0
      %994 = vmatmul.mubr.f32.gmra.mrb[0].mxu0 %v927
      %v995 = vpop.f32.mrb[0].mxu0
      %v996 = vadd.f32 0.0, %v995
      %v997 = vpop.f32.mrb[0].mxu0
      %v998 = vadd.f32 0.0, %v997
      %999 = vdwg.mxu0
      %1000 = vmatprep.subr.mxu0 %v887
      %1001 = vmatpush1.msra.mxu0 %v886
      %1002 = vmatprep.subr.mxu0 %v894
      %1003 = vmatpush1.msra.mxu0 %v893
      %1004 = vmatprep.subr.mxu0 %v901
      %1005 = vmatpush1.msra.mxu0 %v900
      %1006 = vmatprep.subr.mxu0 %v908
      %1007 = vmatpush1.msra.mxu0 %v907
      %1008 = vmatprep.subr.mxu0 %v915
      %1009 = vmatpush1.msra.mxu0 %v914
      %1010 = vmatprep.subr.mxu0 %v922
      %1011 = vmatpush1.msra.mxu0 %v921
      %1012 = vmatprep.subr.mxu0 0.0
      %1013 = vmatpush1.msra.mxu0 0.0
      %1014 = vmatprep.subr.mxu0 0.0
      %1015 = vmatpush1.msra.mxu0 0.0
      %1016 = vmatprep.subr.mxu0 0.0
      %1017 = vmatpush1.msra.mxu0 0.0
      %1018 = vmatprep.subr.mxu0 0.0
      %1019 = vmatpush1.msra.mxu0 0.0
      %1020 = vmatprep.subr.mxu0 0.0
      %1021 = vmatpush1.msra.mxu0 0.0
      %1022 = vmatprep.subr.mxu0 0.0
      %1023 = vmatpush1.msra.mxu0 0.0
      %1024 = vmatprep.subr.mxu0 0.0
      %1025 = vmatpush1.msra.mxu0 0.0
      %1026 = vmatprep.subr.mxu0 0.0
      %1027 = vmatpush1.msra.mxu0 0.0
      %1028 = vmatprep.subr.mxu0 0.0
      %1029 = vmatpush1.msra.mxu0 0.0
      %1030 = vmatprep.subr.mxu0 0.0
      %1031 = vmatpush1.msra.mxu0 0.0
      %1032 = vmatprep.subr.mxu0 0.0
      %1033 = vmatpush1.msra.mxu0 0.0
      %1034 = vmatprep.subr.mxu0 0.0
      %1035 = vmatpush1.msra.mxu0 0.0
      %1036 = vmatprep.subr.mxu0 0.0
      %1037 = vmatpush1.msra.mxu0 0.0
      %1038 = vmatprep.subr.mxu0 0.0
      %1039 = vmatpush1.msra.mxu0 0.0
      %1040 = vmatprep.subr.mxu0 0.0
      %1041 = vmatpush1.msra.mxu0 0.0
      %1042 = vmatprep.subr.mxu0 0.0
      %1043 = vmatpush1.msra.mxu0 0.0
      %1044 = vmatprep.subr.mxu0 0.0
      %1045 = vmatpush1.msra.mxu0 0.0
      %1046 = vmatprep.subr.mxu0 0.0
      %1047 = vmatpush1.msra.mxu0 0.0
      %1048 = vmatprep.subr.mxu0 0.0
      %1049 = vmatpush1.msra.mxu0 0.0
      %1050 = vmatprep.subr.mxu0 0.0
      %1051 = vmatpush1.msra.mxu0 0.0
      %1052 = vmatprep.subr.mxu0 0.0
      %1053 = vmatpush1.msra.mxu0 0.0
      %1054 = vmatprep.subr.mxu0 0.0
      %1055 = vmatpush1.msra.mxu0 0.0
      %1056 = vmatprep.subr.mxu0 0.0
      %1057 = vmatpush1.msra.mxu0 0.0
      %1058 = vmatprep.subr.mxu0 0.0
      %1059 = vmatpush1.msra.mxu0 0.0
      %1060 = vmatprep.subr.mxu0 0.0
      %1061 = vmatpush1.msra.mxu0 0.0
      %1062 = vmatprep.subr.mxu0 0.0
      %1063 = vmatpush1.msra.mxu0 0.0
      %1064 = vmatprep.mubr.f32.mxu0 0.0
      %1065 = vmatmul.mubr.f32.gmra.mrb[0].mxu0 %v927
      %v1066 = vpop.f32.mrb[0].mxu0
      %v1067 = vadd.f32 0.0, %v1066
      %v1068 = vpop.f32.mrb[0].mxu0
      %v1069 = vadd.f32 0.0, %v1068
      %1070 = vdwg.mxu0
      %1071 = vmatprep.subr.mxu0 %v889
      %1072 = vmatpush1.msra.mxu0 %v888
      %1073 = vmatprep.subr.mxu0 %v896
      %1074 = vmatpush1.msra.mxu0 %v895
      %1075 = vmatprep.subr.mxu0 %v903
      %1076 = vmatpush1.msra.mxu0 %v902
      %1077 = vmatprep.subr.mxu0 %v910
      %1078 = vmatpush1.msra.mxu0 %v909
      %1079 = vmatprep.subr.mxu0 %v917
      %1080 = vmatpush1.msra.mxu0 %v916
      %1081 = vmatprep.subr.mxu0 %v924
      %1082 = vmatpush1.msra.mxu0 %v923
      %1083 = vmatprep.subr.mxu0 0.0
      %1084 = vmatpush1.msra.mxu0 0.0
      %1085 = vmatprep.subr.mxu0 0.0
      %1086 = vmatpush1.msra.mxu0 0.0
      %1087 = vmatprep.subr.mxu0 0.0
      %1088 = vmatpush1.msra.mxu0 0.0
      %1089 = vmatprep.subr.mxu0 0.0
      %1090 = vmatpush1.msra.mxu0 0.0
      %1091 = vmatprep.subr.mxu0 0.0
      %1092 = vmatpush1.msra.mxu0 0.0
      %1093 = vmatprep.subr.mxu0 0.0
      %1094 = vmatpush1.msra.mxu0 0.0
      %1095 = vmatprep.subr.mxu0 0.0
      %1096 = vmatpush1.msra.mxu0 0.0
      %1097 = vmatprep.subr.mxu0 0.0
      %1098 = vmatpush1.msra.mxu0 0.0
      %1099 = vmatprep.subr.mxu0 0.0
      %1100 = vmatpush1.msra.mxu0 0.0
      %1101 = vmatprep.subr.mxu0 0.0
      %1102 = vmatpush1.msra.mxu0 0.0
      %1103 = vmatprep.subr.mxu0 0.0
      %1104 = vmatpush1.msra.mxu0 0.0
      %1105 = vmatprep.subr.mxu0 0.0
      %1106 = vmatpush1.msra.mxu0 0.0
      %1107 = vmatprep.subr.mxu0 0.0
      %1108 = vmatpush1.msra.mxu0 0.0
      %1109 = vmatprep.subr.mxu0 0.0
      %1110 = vmatpush1.msra.mxu0 0.0
      %1111 = vmatprep.subr.mxu0 0.0
      %1112 = vmatpush1.msra.mxu0 0.0
      %1113 = vmatprep.subr.mxu0 0.0
      %1114 = vmatpush1.msra.mxu0 0.0
      %1115 = vmatprep.subr.mxu0 0.0
      %1116 = vmatpush1.msra.mxu0 0.0
      %1117 = vmatprep.subr.mxu0 0.0
      %1118 = vmatpush1.msra.mxu0 0.0
      %1119 = vmatprep.subr.mxu0 0.0
      %1120 = vmatpush1.msra.mxu0 0.0
      %1121 = vmatprep.subr.mxu0 0.0
      %1122 = vmatpush1.msra.mxu0 0.0
      %1123 = vmatprep.subr.mxu0 0.0
      %1124 = vmatpush1.msra.mxu0 0.0
      %1125 = vmatprep.subr.mxu0 0.0
      %1126 = vmatpush1.msra.mxu0 0.0
      %1127 = vmatprep.subr.mxu0 0.0
      %1128 = vmatpush1.msra.mxu0 0.0
      %1129 = vmatprep.subr.mxu0 0.0
      %1130 = vmatpush1.msra.mxu0 0.0
      %1131 = vmatprep.subr.mxu0 0.0
      %1132 = vmatpush1.msra.mxu0 0.0
      %1133 = vmatprep.subr.mxu0 0.0
      %1134 = vmatpush1.msra.mxu0 0.0
      %1135 = vmatprep.mubr.f32.mxu0 0.0
      %1136 = vmatmul.mubr.f32.gmra.mrb[0].mxu0 %v927
      %v1137 = vpop.f32.mrb[0].mxu0
      %v1138 = vadd.f32 0.0, %v1137
      %v1139 = vpop.f32.mrb[0].mxu0
      %v1140 = vadd.f32 0.0, %v1139
      %1141 = vdwg.mxu0
      %1142 = vmatprep.subr.mxu0 0.0
      %1143 = vmatpush1.msra.mxu0 %v890
      %1144 = vmatprep.subr.mxu0 0.0
      %1145 = vmatpush1.msra.mxu0 %v897
      %1146 = vmatprep.subr.mxu0 0.0
      %1147 = vmatpush1.msra.mxu0 %v904
      %1148 = vmatprep.subr.mxu0 0.0
      %1149 = vmatpush1.msra.mxu0 %v911
      %1150 = vmatprep.subr.mxu0 0.0
      %1151 = vmatpush1.msra.mxu0 %v918
      %1152 = vmatprep.subr.mxu0 0.0
      %1153 = vmatpush1.msra.mxu0 %v925
      %1154 = vmatprep.subr.mxu0 0.0
      %1155 = vmatpush1.msra.mxu0 0.0
      %1156 = vmatprep.subr.mxu0 0.0
      %1157 = vmatpush1.msra.mxu0 0.0
      %1158 = vmatprep.subr.mxu0 0.0
      %1159 = vmatpush1.msra.mxu0 0.0
      %1160 = vmatprep.subr.mxu0 0.0
      %1161 = vmatpush1.msra.mxu0 0.0
      %1162 = vmatprep.subr.mxu0 0.0
      %1163 = vmatpush1.msra.mxu0 0.0
      %1164 = vmatprep.subr.mxu0 0.0
      %1165 = vmatpush1.msra.mxu0 0.0
      %1166 = vmatprep.subr.mxu0 0.0
      %1167 = vmatpush1.msra.mxu0 0.0
      %1168 = vmatprep.subr.mxu0 0.0
      %1169 = vmatpush1.msra.mxu0 0.0
      %1170 = vmatprep.subr.mxu0 0.0
      %1171 = vmatpush1.msra.mxu0 0.0
      %1172 = vmatprep.subr.mxu0 0.0
      %1173 = vmatpush1.msra.mxu0 0.0
      %1174 = vmatprep.subr.mxu0 0.0
      %1175 = vmatpush1.msra.mxu0 0.0
      %1176 = vmatprep.subr.mxu0 0.0
      %1177 = vmatpush1.msra.mxu0 0.0
      %1178 = vmatprep.subr.mxu0 0.0
      %1179 = vmatpush1.msra.mxu0 0.0
      %1180 = vmatprep.subr.mxu0 0.0
      %1181 = vmatpush1.msra.mxu0 0.0
      %1182 = vmatprep.subr.mxu0 0.0
      %1183 = vmatpush1.msra.mxu0 0.0
      %1184 = vmatprep.subr.mxu0 0.0
      %1185 = vmatpush1.msra.mxu0 0.0
      %1186 = vmatprep.subr.mxu0 0.0
      %1187 = vmatpush1.msra.mxu0 0.0
      %1188 = vmatprep.subr.mxu0 0.0
      %1189 = vmatpush1.msra.mxu0 0.0
      %1190 = vmatprep.subr.mxu0 0.0
      %1191 = vmatpush1.msra.mxu0 0.0
      %1192 = vmatprep.subr.mxu0 0.0
      %1193 = vmatpush1.msra.mxu0 0.0
      %1194 = vmatprep.subr.mxu0 0.0
      %1195 = vmatpush1.msra.mxu0 0.0
      %1196 = vmatprep.subr.mxu0 0.0
      %1197 = vmatpush1.msra.mxu0 0.0
      %1198 = vmatprep.subr.mxu0 0.0
      %1199 = vmatpush1.msra.mxu0 0.0
      %1200 = vmatprep.subr.mxu0 0.0
      %1201 = vmatpush1.msra.mxu0 0.0
      %1202 = vmatprep.subr.mxu0 0.0
      %1203 = vmatpush1.msra.mxu0 0.0
      %1204 = vmatprep.subr.mxu0 0.0
      %1205 = vmatpush1.msra.mxu0 0.0
      %1206 = vmatprep.mubr.f32.mxu0 0.0
      %1207 = vmatmul.mubr.f32.gmra.mrb[0].mxu0 %v927
      %v1208 = vpop.f32.mrb[0].mxu0
      %v1209 = vadd.f32 0.0, %v1208
      %v1210 = vpop.f32.mrb[0].mxu0
      %1211 = vdwg.mxu0
      %v1212 = vadd.f32 %v875, %v996
      %v1213 = vadd.f32 %v876, %v998
      %v1214 = vadd.f32 %v877, %v1067
      %v1215 = vadd.f32 %v878, %v1069
      %v1216 = vadd.f32 %v879, %v1138
      %v1217 = vadd.f32 %v880, %v1140
      %v1218 = vadd.f32 %v881, %v1209
      %1219 = vst [vmem:[%s170] sm:$0xff] %v1212
      %1220 = vst [vmem:[%s170 + $0x8] sm:$0xff] %v1213
      %1221 = vst [vmem:[%s170 + $0x10] sm:$0xff] %v1214
      %1222 = vst [vmem:[%s170 + $0x18] sm:$0xff] %v1215
      %1223 = vst [vmem:[%s170 + $0x20] sm:$0xff] %v1216
      %1224 = vst [vmem:[%s170 + $0x28] sm:$0xff] %v1217
      %1225 = vst [vmem:[%s170 + $0x30] sm:$0xff] %v1218
      %p1226 = scmp.lt.s32.totalorder %s14, 1
      %s1227 = scalar_select %p1226, %s14, 1
      %s1228 = smul.addr %s1227, 7
      %s1229 = smul.addr %s1228, 8
      %s1230 = scalar_lea.vmem %s3, %s1229
      // Predicated region
      $region33: #{conv_small_pallas.1} parent=31 // pred_check
        %p1231 = pneg %p100
      $region34: #{conv_small_pallas.1} parent=31 // pred_check_branch
        %1233 = sbr.rel (%p1231) target = $region36
      $region35: #{conv_small_pallas.1} parent=31 // pred_region
        _
      $region36: #{conv_small_pallas.1} parent=31 // pred_fallthru
        _
    $region32: #{conv_small_pallas.1} parent=5 // pred_fallthru
      _
    %p1234 = scmp.le.s32.totalorder 2, %s9
    // Predicated region
    $region37: #{conv_small_pallas.1} parent=5 // pred_check
      %p1235 = pneg %p1234
    $region38: #{conv_small_pallas.1} parent=5 // pred_check_branch
      %1237 = sbr.rel (%p1235) target = $region40
    $region39: #{conv_small_pallas.1} parent=5 // pred_region
      %s1238 = ssub.s32 %s9, 2
      // Predicated region
      $region41: #{conv_small_pallas.1} parent=39 // pred_check
        %p1239 = pneg %p106
      $region42: #{conv_small_pallas.1} parent=39 // pred_check_branch
        %1241 = sbr.rel (%p1239) target = $region44
      $region43: #{conv_small_pallas.1} parent=39 // pred_region
        %p1242 = scmp.lt.s32.totalorder %s15, 1
        %s1243 = scalar_select %p1242, %s15, 1
        %s1244 = smul.addr %s1243, 7
        %s1245 = smul.addr %s1244, 8
        %s1246 = scalar_lea.vmem %s3, %s1245
      $region44: #{conv_small_pallas.1} parent=39 // pred_fallthru
        _
    $region40: #{conv_small_pallas.1} parent=5 // pred_fallthru
      _
  $region6: #{conv_small_pallas.1} parent=0 // loop_footer
    %s13 = sadd.s32 1, %s9
  $region7: #{conv_small_pallas.1} parent=0 // loop_footer_branch
    %8 = sbr.rel target = $region3
  $region8: #{conv_small_pallas.1} parent=0 // loop_exit
    _

</llo_original>
